<compile_context>
chip_gen: v7x
topology: tpu7x:2x2x1
jax: 0.10.0
libtpu: 0.0.40
codegen_flags: <defaults>
</compile_context>

<pallas_src>
import jax
import jax.numpy as jnp
from jax.experimental import pallas as pl
from jax.experimental.pallas import tpu as pltpu

ALPHA = 0  # matches the module: self.alpha = 0 -> complete detach


# ----------------------------------------------------------------------------
# Production path (recommended): no kernel, no HBM traffic.
# ----------------------------------------------------------------------------
def partial_detach(x, alpha=ALPHA):
    """Value-exact equivalent of Partial_Detach()(x) with zero extra cost."""
    if alpha == 0:
        return jax.lax.stop_gradient(x)          # complete detach
    if alpha == 1:
        return x                                 # identity
    return x * alpha + jax.lax.stop_gradient(x) * (1 - alpha)


# ----------------------------------------------------------------------------
# Explicit Pallas kernel path (materialized copy, HBM-bandwidth bound).
# ----------------------------------------------------------------------------
def _copy_kernel(x_ref, o_ref):
    # Pure streaming copy: vld + vst only, no VALU work.
    o_ref[...] = x_ref[...]


def _round_up(v, m):
    return ((v + m - 1) // m) * m


def _tile_budget():
    """Generation-aware (tile_bytes, vmem_limit_bytes)."""
    vmem_cap = 64 << 20  # conservative (v7x per-TC) default
    try:
        info = pltpu.get_tpu_info()
        cap = getattr(info, "vmem_capacity_bytes", None)
        if cap:
            vmem_cap = int(cap)
    except Exception:
        pass
    if vmem_cap >= (100 << 20):       # v5e / v6e: 128 MiB physical VMEM
        return 16 << 20, 80 << 20
    return 8 << 20, 40 << 20          # v7x: 64 MiB physical VMEM


def _row_tile(rows, lanes, itemsize, max_tile_bytes):
    """Dtype-aware row tile: multiple of the sublane pack, multi-MiB, and
    (when the array is large enough) producing >= 2 grid steps for v7x."""
    sub = {4: 8, 2: 16, 1: 32}.get(itemsize, 8)
    if rows < 2 * sub:
        return rows  # single full-dim block (always legal for tiny inputs)
    max_rows = max(sub, ((max_tile_bytes // (lanes * itemsize)) // sub) * sub)
    # Aim for at least two grid steps so both v7x TensorCores get a share.
    target = _round_up(-(-rows // 2), sub)
    return min(max_rows, target)


def _pallas_copy(x):
    """Identity copy of x through a Pallas kernel (lane-dense, big tiles)."""
    shape, dtype = x.shape, x.dtype
    itemsize = jnp.dtype(dtype).itemsize
    flat = x.reshape(-1)
    n = flat.size
    max_tile_bytes, vmem_limit = _tile_budget()

    # 128-aligned main slab; the (tiny, < 128 elem) tail is handled in JAX.
    n_main = (n // 128) * 128
    tail = flat[n_main:]

    if n_main == 0:
        y_main = flat[:0]
    else:
        main = flat[:n_main]
        lanes = 128
        for cand in (2048, 1024, 512, 256, 128):   # prefer 1024-2048 lanes
            if n_main % cand == 0:
                lanes = cand
                break
        rows = n_main // lanes
        tr = _row_tile(rows, lanes, itemsize, max_tile_bytes)
        grid = (pl.cdiv(rows, tr),)                # ragged last block is masked

        x2d = main.reshape(rows, lanes)            # layout glue only
        y2d = pl.pallas_call(
            _copy_kernel,
            out_shape=jax.ShapeDtypeStruct((rows, lanes), dtype),
            grid_spec=pltpu.PrefetchScalarGridSpec(
                num_scalar_prefetch=0,
                grid=grid,
                in_specs=[pl.BlockSpec((tr, lanes), lambda i: (i, 0))],
                out_specs=pl.BlockSpec((tr, lanes), lambda i: (i, 0)),
            ),
            input_output_aliases={0: 0},           # no second HBM output buffer
            compiler_params=pltpu.CompilerParams(
                dimension_semantics=("parallel",),
                vmem_limit_bytes=vmem_limit,
            ),
        )(x2d)
        y_main = y2d.reshape(-1)

    if tail.size:
        # TODO(synk): tiny misaligned remainder copied in plain JAX (concat).
        y_flat = jnp.concatenate([y_main, tail])
    else:
        y_flat = y_main
    return y_flat.reshape(shape)


@jax.custom_vjp
def partial_detach_pallas(x):
    """Pallas-kernel version of Partial_Detach()(x).

    Forward values are an exact identity of x (true for every alpha, since
    x*a + x*(1-a) == x).  Gradient semantics (detach / blend) live in the
    custom VJP, so jax.grad never differentiates through pl.pallas_call.
    """
    return _pallas_copy(x)


def _partial_detach_fwd(x):
    return _pallas_copy(x), None


def _partial_detach_bwd(_, g):
    if ALPHA == 0:
        return (jnp.zeros_like(g),)      # complete detach
    elif ALPHA == 1:
        return (g,)                      # identity
    else:
        return ((ALPHA * g).astype(g.dtype),)


partial_detach_pallas.defvjp(_partial_detach_fwd, _partial_detach_bwd)


if __name__ == "__main__":
    key = jax.random.PRNGKey(0)
    x = jax.random.normal(key, (2, 4, 16, 16), dtype=jnp.float32)  # NCHW

    # --- Production path: pass-through + stop_gradient (no kernel) ---
    y_fast = partial_detach(x)
    jax.block_until_ready(y_fast)
    assert y_fast.shape == x.shape and y_fast.dtype == x.dtype
    assert bool(jnp.allclose(y_fast, x))
    g_fast = jax.grad(lambda a: jnp.sum(partial_detach(a) ** 2))(x)
    jax.block_until_ready(g_fast)
    assert bool(jnp.allclose(g_fast, jnp.zeros_like(g_fast)))

    # --- Explicit Pallas kernel path (materialized identity copy) ---
    y = partial_detach_pallas(x)
    jax.block_until_ready(y)
    assert y.shape == x.shape and y.dtype == x.dtype
    assert bool(jnp.allclose(y, x))
    g = jax.grad(lambda a: jnp.sum(partial_detach_pallas(a) ** 2))(x)
    jax.block_until_ready(g)
    assert bool(jnp.allclose(g, jnp.zeros_like(g)))

    print("KERNEL_OK")
</pallas_src>

<mosaic_0001>
module attributes {stable_mosaic.version = 11 : i64} {
  func.func @_copy_kernel(%arg0: i32, %arg1: memref<1x2048xf32, #tpu.memory_space<vmem>>, %arg2: memref<1x2048xf32, #tpu.memory_space<vmem>>) attributes {dimension_semantics = [#tpu.dimension_semantics<parallel>], iteration_bounds = array<i64: 1>, scalar_prefetch = 0 : i64, scratch_operands = 0 : i64, tpu.core_type = #tpu.core_type<tc>, window_params = [{transform_indices = @transform_0, window_bounds = array<i64: 1, 2048>}, {transform_indices = @transform_1, window_bounds = array<i64: 1, 2048>}]} {
    %c0 = arith.constant 0 : index
    %c0_0 = arith.constant 0 : index
    %0 = vector.load %arg1[%c0, %c0_0] : memref<1x2048xf32, #tpu.memory_space<vmem>>, vector<1x2048xf32>
    %c0_1 = arith.constant 0 : index
    %c0_2 = arith.constant 0 : index
    %1 = vector.load %arg2[%c0_1, %c0_2] : memref<1x2048xf32, #tpu.memory_space<vmem>>, vector<1x2048xf32>
    tpu.vector_store %arg2[%c0_1, %c0_2], %0 {strides = array<i32>} : memref<1x2048xf32, #tpu.memory_space<vmem>>, vector<1x2048xf32>,
    return
  }
  func.func @transform_0(%arg0: i32) -> (i32, i32) {
    %c0_i32 = arith.constant 0 : i32
    %c0_i32_0 = arith.constant 0 : i32
    return %arg0, %c0_i32 : i32, i32
  }
  func.func @transform_1(%arg0: i32) -> (i32, i32) {
    %c0_i32 = arith.constant 0 : i32
    %c0_i32_0 = arith.constant 0 : i32
    return %arg0, %c0_i32 : i32, i32
  }
}

</mosaic_0001>

<llo_original>
// kernel: tpu_custom_call.1
$region0: #{tpu_custom_call.1}
  #allocation0 [shape = 'u32[]', space=smem, size = 0x4, offset = 0x4, fixed_abs, tag = 'smem constant byte address 0x4 - core index']
  #allocation1 [shape = 'u32[144,128]{1,0:T(1,128)}', space=vmem, size = 0x12000, scoped, tag = 'internal scratch']
  %s0 = inlined_call_operand.hbm [shape: f32[1,2048], index: 0, kind: input, shape index: {}, may-alias: {0,1}]
  %s1 = inlined_call_operand.hbm [shape: f32[1,2048], index: 1, kind: output, shape index: {}, may-alias: {0,1}]
  %s2 = sld [smem:[#allocation0]]
  $region18: #{tpu_custom_call.1} parent=0
    _
  %s4 = ssub.s32 1, %s2
  %s5 = scalar_select 0, %s4, %s2
  $region1: #{tpu_custom_call.1} parent=0
    #allocation2 [shape = 'u8[8192]{0}', space=vmem, size = 0x2000, scoped, tag = 'input window, operand 0, single buffered']
    #allocation3 [shape = 's32[1]{0}', space=sflag, size = 0x4, scoped, tag = 'scoped memory for tpu_custom_call.1']
    #allocation4 [shape = 's32[1]{0}', space=sflag, size = 0x4, scoped, tag = 'scoped memory for tpu_custom_call.1']
    #allocation5 [shape = 'u8[8192]{0}', space=vmem, size = 0x2000, scoped, tag = 'output window, operand 0, single buffered']
    %6 = vsyncpa [#allocation3], 0
    %7 = vsyncpa [#allocation4], 0
    // Predicated region
    $region2: #{tpu_custom_call.1} parent=1 // pred_check
      _
    $region3: #{tpu_custom_call.1} parent=1 // pred_check_branch
      %9 = sbr.rel (0) target = $region5
    $region4: #{tpu_custom_call.1} parent=1 // pred_region
      %s11 = ssub.s32 256, 256
      %12 = vsyncadd [#allocation3], %s11
      %s14 = sshll.u32 [#allocation2], 4
      %s15 = int_to_ptr.vmem [resolvable:$true] %s14
      %17 = dma.hbm_to_vmem [thread:$0]  %s0, 256, %s15, [#allocation3]
    $region5: #{tpu_custom_call.1} parent=1 // pred_fallthru
      _
    // Predicated region
    $region6: #{tpu_custom_call.1} parent=1 // pred_check
      _
    $region7: #{tpu_custom_call.1} parent=1 // pred_check_branch
      %19 = sbr.rel (0) target = $region9
    $region8: #{tpu_custom_call.1} parent=1 // pred_region
      %20 = dma.done [#allocation3], 256
    $region9: #{tpu_custom_call.1} parent=1 // pred_fallthru
      _
    %v21 = vld [vmem:[#allocation2] sm:$0xff]
    %v22 = vld [vmem:[#allocation2 + $0x8] sm:$0xff]
    %23 = vst [vmem:[#allocation5] sm:$0xff] %v21
    %24 = vst [vmem:[#allocation5 + $0x8] sm:$0xff] %v22
    // Predicated region
    $region10: #{tpu_custom_call.1} parent=1 // pred_check
      _
    $region11: #{tpu_custom_call.1} parent=1 // pred_check_branch
      %26 = sbr.rel (0) target = $region13
    $region12: #{tpu_custom_call.1} parent=1 // pred_region
      %s28 = ssub.s32 256, 256
      %29 = vsyncadd [#allocation4], %s28
      %s31 = sshll.u32 [#allocation5], 4
      %s32 = int_to_ptr.vmem [resolvable:$true] %s31
      %34 = dma.vmem_to_hbm [thread:$0]  %s32, 256, %s1, [#allocation4]
    $region13: #{tpu_custom_call.1} parent=1 // pred_fallthru
      _
    // Predicated region
    $region14: #{tpu_custom_call.1} parent=1 // pred_check
      _
    $region15: #{tpu_custom_call.1} parent=1 // pred_check_branch
      %36 = sbr.rel (0) target = $region17
    $region16: #{tpu_custom_call.1} parent=1 // pred_region
      %37 = dma.done [#allocation4], 256
    $region17: #{tpu_custom_call.1} parent=1 // pred_fallthru
      _
    %38 = vsyncpa [#allocation3], 1
    %39 = vsyncpa [#allocation4], 1

</llo_original>
